<compile_context>
chip_gen: v7x
topology: tpu7x:2x2x1
jax: 0.10.0
libtpu: 0.0.40
codegen_flags: <defaults>
</compile_context>

<pallas_src>
import functools

import jax
import jax.numpy as jnp
from jax.experimental import pallas as pl
from jax.experimental.pallas import tpu as pltpu


def _disc_kernel(z_ref, w1_ref, b1_ref, w2_ref, b2_ref, w3_ref, b3_ref, o_ref):
    # Layer 1: Linear(z_dim -> 512) + ReLU.  bf16 MXU operands, f32 accumulate.
    z = z_ref[...].astype(jnp.bfloat16)
    h1 = jnp.dot(z, w1_ref[...], preferred_element_type=jnp.float32)
    h1 = jnp.maximum(h1 + b1_ref[...], 0.0)

    # Layer 2: Linear(512 -> 512) + ReLU (dominant matmul).
    h2 = jnp.dot(h1.astype(jnp.bfloat16), w2_ref[...],
                 preferred_element_type=jnp.float32)
    h2 = jnp.maximum(h2 + b2_ref[...], 0.0)

    # Layer 3: Linear(512 -> 1) as VPU multiply + XLU lane-reduction
    # (keeps the N=1 matmul off the MXU).  b3 is a scalar read from SMEM.
    logit = jnp.sum(h2 * w3_ref[...], axis=-1, keepdims=True) + b3_ref[0, 0]

    # Sigmoid on the EUP, store f32.
    o_ref[...] = jax.nn.sigmoid(logit).astype(o_ref.dtype)


def _round_up(x, m):
    return ((x + m - 1) // m) * m


@functools.partial(jax.jit, static_argnames=("tm",))
def discriminator_forward(z, params, *, tm=256):
    """z: (B, z_dim) float32. Returns (B, 1) float32 in (0, 1)."""
    w1, b1, w2, b2, w3_row, b3 = params
    B, z_dim = z.shape
    H = w1.shape[1]

    # Batch tile: 256 rows matches the v6e/v7x 256-wide MXU; for small batches
    # just round up to a sublane multiple and run a single tile.
    TM = tm if B >= tm else _round_up(B, 8)
    B_pad = _round_up(B, TM)
    if B_pad != B:
        z = jnp.pad(z, ((0, B_pad - B), (0, 0)))
    grid = (B_pad // TM,)

    resident = lambda shape: pl.BlockSpec(shape, lambda i: (0,) * len(shape))

    out = pl.pallas_call(
        _disc_kernel,
        out_shape=jax.ShapeDtypeStruct((B_pad, 1), jnp.float32),
        grid=grid,
        in_specs=[
            pl.BlockSpec((TM, z_dim), lambda i: (i, 0)),   # z tile streams
            resident((z_dim, H)),                          # w1 (bf16), resident
            resident((1, H)),                              # b1 (f32)
            resident((H, H)),                              # w2 (bf16), resident
            resident((1, H)),                              # b2 (f32)
            resident((1, H)),                              # w3 row (f32)
            pl.BlockSpec(memory_space=pltpu.MemorySpace.SMEM),  # b3 scalar
        ],
        out_specs=pl.BlockSpec((TM, 1), lambda i: (i, 0)),
        compiler_params=pltpu.CompilerParams(
            dimension_semantics=("parallel",)),
    )(z, w1, b1, w2, b2, w3_row, b3)

    return out[:B]


def init_params(key, z_dim=32, hidden=512):
    """Kaiming-normal init (fan_in, gain=sqrt(2)); biases zero.

    Matches PyTorch's init.kaiming_normal_(weight) + bias.fill_(0).  Weights
    are stored transposed as (in, out); w1/w2 are cast to bf16 for the MXU,
    w3 is stored as a (1, hidden) f32 row for the VPU reduction.
    """
    k1, k2, k3 = jax.random.split(key, 3)

    def kaiming(k, fan_in, fan_out):
        std = (2.0 / fan_in) ** 0.5
        return jax.random.normal(k, (fan_in, fan_out), jnp.float32) * std

    w1 = kaiming(k1, z_dim, hidden).astype(jnp.bfloat16)
    b1 = jnp.zeros((1, hidden), jnp.float32)
    w2 = kaiming(k2, hidden, hidden).astype(jnp.bfloat16)
    b2 = jnp.zeros((1, hidden), jnp.float32)
    w3_row = kaiming(k3, hidden, 1).reshape(1, hidden)      # stored as a row
    b3 = jnp.zeros((1, 1), jnp.float32)
    return (w1, b1, w2, b2, w3_row, b3)


def _reference_forward(z, params):
    """Pure-JAX reference with the same dtype policy (bf16 matmul, f32 acc)."""
    w1, b1, w2, b2, w3_row, b3 = params
    h1 = jnp.maximum(
        jnp.dot(z.astype(jnp.bfloat16), w1, preferred_element_type=jnp.float32)
        + b1, 0.0)
    h2 = jnp.maximum(
        jnp.dot(h1.astype(jnp.bfloat16), w2, preferred_element_type=jnp.float32)
        + b2, 0.0)
    logit = jnp.sum(h2 * w3_row, axis=-1, keepdims=True) + b3[0, 0]
    return jax.nn.sigmoid(logit)


if __name__ == "__main__":
    key = jax.random.PRNGKey(0)
    k_z, k_z2, k_p = jax.random.split(key, 3)

    Z_DIM = 32
    params = init_params(k_p, z_dim=Z_DIM, hidden=512)

    # Small-batch case (single tile).
    BATCH = 8
    z = jax.random.normal(k_z, (BATCH, Z_DIM), jnp.float32)
    out = jax.block_until_ready(discriminator_forward(z, params))
    ref = _reference_forward(z, params)
    assert out.shape == (BATCH, 1)
    assert bool(jnp.all(jnp.isfinite(out)))
    assert jnp.allclose(out, ref, atol=2e-4, rtol=2e-4)

    # Multi-tile case (exercises batch tiling + padding + resident weights).
    B2, TM2 = 200, 128
    z2 = jax.random.normal(k_z2, (B2, Z_DIM), jnp.float32)
    out2 = jax.block_until_ready(discriminator_forward(z2, params, tm=TM2))
    ref2 = _reference_forward(z2, params)
    assert out2.shape == (B2, 1)
    assert jnp.allclose(out2, ref2, atol=2e-4, rtol=2e-4)

    print("KERNEL_OK")
</pallas_src>

<mosaic_0001>
module attributes {stable_mosaic.version = 11 : i64} {
  func.func @_disc_kernel(%arg0: i32, %arg1: memref<8x32xf32, #tpu.memory_space<vmem>>, %arg2: memref<32x512xbf16, #tpu.memory_space<vmem>>, %arg3: memref<1x512xf32, #tpu.memory_space<vmem>>, %arg4: memref<512x512xbf16, #tpu.memory_space<vmem>>, %arg5: memref<1x512xf32, #tpu.memory_space<vmem>>, %arg6: memref<1x512xf32, #tpu.memory_space<vmem>>, %arg7: memref<1x1xf32, #tpu.memory_space<smem>>, %arg8: memref<8x1xf32, #tpu.memory_space<vmem>>) attributes {dimension_semantics = [#tpu.dimension_semantics<parallel>], iteration_bounds = array<i64: 1>, scalar_prefetch = 0 : i64, scratch_operands = 0 : i64, tpu.core_type = #tpu.core_type<tc>, window_params = [{transform_indices = @transform_0, window_bounds = array<i64: 8, 32>}, {pipeline_mode = #tpu.pipeline_mode<synchronous>, transform_indices = @transform_1, window_bounds = array<i64: 32, 512>}, {pipeline_mode = #tpu.pipeline_mode<synchronous>, transform_indices = @transform_2, window_bounds = array<i64: 1, 512>}, {pipeline_mode = #tpu.pipeline_mode<synchronous>, transform_indices = @transform_3, window_bounds = array<i64: 512, 512>}, {pipeline_mode = #tpu.pipeline_mode<synchronous>, transform_indices = @transform_4, window_bounds = array<i64: 1, 512>}, {pipeline_mode = #tpu.pipeline_mode<synchronous>, transform_indices = @transform_5, window_bounds = array<i64: 1, 512>}, {transform_indices = @transform_6, window_bounds = array<i64: 1, 1>}, {transform_indices = @transform_7, window_bounds = array<i64: 8, 1>}]} {
    %c0 = arith.constant 0 : index
    %c0_0 = arith.constant 0 : index
    %0 = vector.load %arg1[%c0, %c0_0] : memref<8x32xf32, #tpu.memory_space<vmem>>, vector<8x32xf32>
    %1 = arith.truncf %0 : vector<8x32xf32> to vector<8x32xbf16>
    %c0_1 = arith.constant 0 : index
    %c0_2 = arith.constant 0 : index
    %2 = vector.load %arg2[%c0_1, %c0_2] : memref<32x512xbf16, #tpu.memory_space<vmem>>, vector<32x512xbf16>
    %cst = arith.constant dense<0.000000e+00> : vector<8x512xf32>
    %3 = tpu.matmul %1, %2, %cst {dimension_numbers = #tpu.dot_dimension_numbers<[1], [0], [0], [1], [0, 0, 1, 1], [], []>} : vector<8x32xbf16>, vector<32x512xbf16>, vector<8x512xf32> -> vector<8x512xf32>
    %c0_3 = arith.constant 0 : index
    %c0_4 = arith.constant 0 : index
    %4 = vector.load %arg3[%c0_3, %c0_4] : memref<1x512xf32, #tpu.memory_space<vmem>>, vector<1x512xf32>
    %5 = vector.broadcast %4 : vector<1x512xf32> to vector<8x512xf32>
    %6 = arith.addf %3, %5 : vector<8x512xf32>
    %cst_5 = arith.constant 0.000000e+00 : f32
    %7 = vector.broadcast %cst_5 : f32 to vector<8x512xf32>
    %8 = arith.maximumf %6, %7 : vector<8x512xf32>
    %9 = arith.truncf %8 : vector<8x512xf32> to vector<8x512xbf16>
    %c0_6 = arith.constant 0 : index
    %c0_7 = arith.constant 0 : index
    %10 = vector.load %arg4[%c0_6, %c0_7] : memref<512x512xbf16, #tpu.memory_space<vmem>>, vector<512x512xbf16>
    %cst_8 = arith.constant dense<0.000000e+00> : vector<8x512xf32>
    %11 = tpu.matmul %9, %10, %cst_8 {dimension_numbers = #tpu.dot_dimension_numbers<[1], [0], [0], [1], [0, 0, 1, 1], [], []>} : vector<8x512xbf16>, vector<512x512xbf16>, vector<8x512xf32> -> vector<8x512xf32>
    %c0_9 = arith.constant 0 : index
    %c0_10 = arith.constant 0 : index
    %12 = vector.load %arg5[%c0_9, %c0_10] : memref<1x512xf32, #tpu.memory_space<vmem>>, vector<1x512xf32>
    %13 = vector.broadcast %12 : vector<1x512xf32> to vector<8x512xf32>
    %14 = arith.addf %11, %13 : vector<8x512xf32>
    %cst_11 = arith.constant 0.000000e+00 : f32
    %15 = vector.broadcast %cst_11 : f32 to vector<8x512xf32>
    %16 = arith.maximumf %14, %15 : vector<8x512xf32>
    %c0_12 = arith.constant 0 : index
    %c0_13 = arith.constant 0 : index
    %17 = vector.load %arg6[%c0_12, %c0_13] : memref<1x512xf32, #tpu.memory_space<vmem>>, vector<1x512xf32>
    %18 = vector.broadcast %17 : vector<1x512xf32> to vector<8x512xf32>
    %19 = arith.mulf %16, %18 : vector<8x512xf32>
    %cst_14 = arith.constant dense<0.000000e+00> : vector<8xf32>
    %20 = vector.multi_reduction <add>, %19, %cst_14 [1] : vector<8x512xf32> to vector<8xf32>
    %21 = vector.shape_cast %20 : vector<8xf32> to vector<8x1xf32>
    %c0_15 = arith.constant 0 : index
    %c0_16 = arith.constant 0 : index
    %22 = memref.load %arg7[%c0_15, %c0_16] : memref<1x1xf32, #tpu.memory_space<smem>>
    %23 = vector.broadcast %22 : f32 to vector<8x1xf32>
    %24 = arith.addf %21, %23 : vector<8x1xf32>
    %25 = arith.negf %24 : vector<8x1xf32>
    %26 = math.exp %25 : vector<8x1xf32>
    %cst_17 = arith.constant 1.000000e+00 : f32
    %27 = vector.broadcast %cst_17 : f32 to vector<8x1xf32>
    %28 = arith.addf %27, %26 : vector<8x1xf32>
    %29 = arith.divf %27, %28 : vector<8x1xf32>
    %c0_18 = arith.constant 0 : index
    %c0_19 = arith.constant 0 : index
    %30 = vector.load %arg8[%c0_18, %c0_19] : memref<8x1xf32, #tpu.memory_space<vmem>>, vector<8x1xf32>
    tpu.vector_store %arg8[%c0_18, %c0_19], %29 {strides = array<i32>} : memref<8x1xf32, #tpu.memory_space<vmem>>, vector<8x1xf32>,
    return
  }
  func.func @transform_0(%arg0: i32) -> (i32, i32) {
    %c0_i32 = arith.constant 0 : i32
    %c0_i32_0 = arith.constant 0 : i32
    return %arg0, %c0_i32 : i32, i32
  }
  func.func @transform_1(%arg0: i32) -> (i32, i32) {
    %c0_i32 = arith.constant 0 : i32
    %c0_i32_0 = arith.constant 0 : i32
    %c0_i32_1 = arith.constant 0 : i32
    return %c0_i32, %c0_i32_0 : i32, i32
  }
  func.func @transform_2(%arg0: i32) -> (i32, i32) {
    %c0_i32 = arith.constant 0 : i32
    %c0_i32_0 = arith.constant 0 : i32
    %c0_i32_1 = arith.constant 0 : i32
    return %c0_i32, %c0_i32_0 : i32, i32
  }
  func.func @transform_3(%arg0: i32) -> (i32, i32) {
    %c0_i32 = arith.constant 0 : i32
    %c0_i32_0 = arith.constant 0 : i32
    %c0_i32_1 = arith.constant 0 : i32
    return %c0_i32, %c0_i32_0 : i32, i32
  }
  func.func @transform_4(%arg0: i32) -> (i32, i32) {
    %c0_i32 = arith.constant 0 : i32
    %c0_i32_0 = arith.constant 0 : i32
    %c0_i32_1 = arith.constant 0 : i32
    return %c0_i32, %c0_i32_0 : i32, i32
  }
  func.func @transform_5(%arg0: i32) -> (i32, i32) {
    %c0_i32 = arith.constant 0 : i32
    %c0_i32_0 = arith.constant 0 : i32
    %c0_i32_1 = arith.constant 0 : i32
    return %c0_i32, %c0_i32_0 : i32, i32
  }
  func.func @transform_6(%arg0: i32) -> (i32, i32) {
    %c0_i32 = arith.constant 0 : i32
    %c0_i32_0 = arith.constant 0 : i32
    %c0_i32_1 = arith.constant 0 : i32
    return %c0_i32, %c0_i32_0 : i32, i32
  }
  func.func @transform_7(%arg0: i32) -> (i32, i32) {
    %c0_i32 = arith.constant 0 : i32
    %c0_i32_0 = arith.constant 0 : i32
    return %arg0, %c0_i32 : i32, i32
  }
}

</mosaic_0001>

<llo_original>
// kernel: discriminator_forward.1
$region0: #{discriminator_forward.1}
  #allocation0 [shape = 'u32[]', space=smem, size = 0x4, offset = 0x4, fixed_abs, tag = 'smem constant byte address 0x4 - core index']
  #allocation1 [shape = 'u32[144,128]{1,0:T(1,128)}', space=vmem, size = 0x12000, scoped, tag = 'internal scratch']
  #allocation2 [shape = 'f32[1,1]{1,0:T(1,128)S(6)}', space=smem, size = 0x200, scoped, tag = 'scoped memory for discriminator_forward.1']
  %s0 = inlined_call_operand.hbm [shape: f32[8,32], index: 0, kind: input, shape index: {}]
  %s1 = inlined_call_operand.hbm [shape: bf16[32,512], index: 1, kind: input, shape index: {}]
  %s2 = inlined_call_operand.vmem [shape: f32[1,512], index: 2, kind: input, shape index: {}]
  %s3 = inlined_call_operand.hbm [shape: bf16[512,512], index: 3, kind: input, shape index: {}]
  %s4 = inlined_call_operand.vmem [shape: f32[1,512], index: 4, kind: input, shape index: {}]
  %s5 = inlined_call_operand.vmem [shape: f32[1,512], index: 5, kind: input, shape index: {}]
  %s6 = inlined_call_operand.<no memory space> [shape: f32[1,1], index: 6, kind: input, shape index: {}]
  %s7 = inlined_call_operand.vmem [shape: f32[8,1], index: 7, kind: output, shape index: {}]
  %s8 = sld [smem:[#allocation0]]
  $region50: #{discriminator_forward.1} parent=0
    _
  %s10 = ssub.s32 1, %s8
  %s11 = scalar_select 0, %s10, %s8
  %12 = sst [smem:[#allocation2]] %s6
  $region1: #{discriminator_forward.1} parent=0
    #allocation3 [shape = 'u8[4096]{0}', space=vmem, size = 0x1000, scoped, tag = 'input window, operand 0, single buffered']
    #allocation4 [shape = 's32[1]{0}', space=sflag, size = 0x4, scoped, tag = 'scoped memory for discriminator_forward.1']
    #allocation5 [shape = 'u8[32768]{0}', space=vmem, size = 0x8000, scoped, tag = 'input window, operand 1, single buffered']
    #allocation6 [shape = 's32[1]{0}', space=sflag, size = 0x4, scoped, tag = 'scoped memory for discriminator_forward.1']
    #allocation7 [shape = 'u8[524288]{0}', space=vmem, size = 0x80000, scoped, tag = 'input window, operand 3, single buffered']
    %13 = vsyncpa [#allocation4], 0
    %14 = vsyncpa [#allocation6], 0
    // Predicated region
    $region2: #{discriminator_forward.1} parent=1 // pred_check
      _
    $region3: #{discriminator_forward.1} parent=1 // pred_check_branch
      %16 = sbr.rel (0) target = $region5
    $region4: #{discriminator_forward.1} parent=1 // pred_region
      %s18 = ssub.s32 128, 128
      %19 = vsyncadd [#allocation4], %s18
      %s21 = sshll.u32 [#allocation3], 4
      %s22 = int_to_ptr.vmem [resolvable:$true] %s21
      %24 = dma.hbm_to_vmem [thread:$0]  %s0, 128, %s22, [#allocation4]
    $region5: #{discriminator_forward.1} parent=1 // pred_fallthru
      _
    // Predicated region
    $region6: #{discriminator_forward.1} parent=1 // pred_check
      _
    $region7: #{discriminator_forward.1} parent=1 // pred_check_branch
      %26 = sbr.rel (0) target = $region9
    $region8: #{discriminator_forward.1} parent=1 // pred_region
      %s28 = ssub.s32 1024, 1024
      %29 = vsyncadd [#allocation6], %s28
      %s30 = sshll.u32 [#allocation5], 4
      %s31 = int_to_ptr.vmem [resolvable:$true] %s30
      %36 = dma.hbm_to_vmem [thread:$0]  %s1, 1024, %s31, [#allocation6], 256, 256, 16
    $region9: #{discriminator_forward.1} parent=1 // pred_fallthru
      _
    // Predicated region
    $region10: #{discriminator_forward.1} parent=1 // pred_check
      _
    $region11: #{discriminator_forward.1} parent=1 // pred_check_branch
      %38 = sbr.rel (0) target = $region13
    $region12: #{discriminator_forward.1} parent=1 // pred_region
      _
    $region13: #{discriminator_forward.1} parent=1 // pred_fallthru
      _
    // Predicated region
    $region14: #{discriminator_forward.1} parent=1 // pred_check
      _
    $region15: #{discriminator_forward.1} parent=1 // pred_check_branch
      %40 = sbr.rel (0) target = $region17
    $region16: #{discriminator_forward.1} parent=1 // pred_region
      %s42 = ssub.s32 16384, 16384
      %43 = vsyncadd [#allocation6], %s42
      %s44 = sshll.u32 [#allocation7], 4
      %s45 = int_to_ptr.vmem [resolvable:$true] %s44
      %50 = dma.hbm_to_vmem [thread:$0]  %s3, 16384, %s45, [#allocation6], 256, 256, 16
    $region17: #{discriminator_forward.1} parent=1 // pred_fallthru
      _
    // Predicated region
    $region18: #{discriminator_forward.1} parent=1 // pred_check
      _
    $region19: #{discriminator_forward.1} parent=1 // pred_check_branch
      %52 = sbr.rel (0) target = $region21
    $region20: #{discriminator_forward.1} parent=1 // pred_region
      _
    $region21: #{discriminator_forward.1} parent=1 // pred_fallthru
      _
    // Predicated region
    $region22: #{discriminator_forward.1} parent=1 // pred_check
      _
    $region23: #{discriminator_forward.1} parent=1 // pred_check_branch
      %54 = sbr.rel (0) target = $region25
    $region24: #{discriminator_forward.1} parent=1 // pred_region
      _
    $region25: #{discriminator_forward.1} parent=1 // pred_fallthru
      _
    // Predicated region
    $region26: #{discriminator_forward.1} parent=1 // pred_check
      _
    $region27: #{discriminator_forward.1} parent=1 // pred_check_branch
      %56 = sbr.rel (0) target = $region29
    $region28: #{discriminator_forward.1} parent=1 // pred_region
      _
    $region29: #{discriminator_forward.1} parent=1 // pred_fallthru
      _
    // Predicated region
    $region30: #{discriminator_forward.1} parent=1 // pred_check
      _
    $region31: #{discriminator_forward.1} parent=1 // pred_check_branch
      %58 = sbr.rel (0) target = $region33
    $region32: #{discriminator_forward.1} parent=1 // pred_region
      %59 = dma.done [#allocation4], 128
    $region33: #{discriminator_forward.1} parent=1 // pred_fallthru
      _
    // Predicated region
    $region34: #{discriminator_forward.1} parent=1 // pred_check
      _
    $region35: #{discriminator_forward.1} parent=1 // pred_check_branch
      %61 = sbr.rel (0) target = $region37
    $region36: #{discriminator_forward.1} parent=1 // pred_region
      %62 = dma.done [#allocation6], 1024
    $region37: #{discriminator_forward.1} parent=1 // pred_fallthru
      _
    // Predicated region
    $region38: #{discriminator_forward.1} parent=1 // pred_check
      _
    $region39: #{discriminator_forward.1} parent=1 // pred_check_branch
      %64 = sbr.rel (0) target = $region41
    $region40: #{discriminator_forward.1} parent=1 // pred_region
      %65 = dma.done [#allocation6], 16384
    $region41: #{discriminator_forward.1} parent=1 // pred_fallthru
      _
    %v67 = vld [vmem:[#allocation3] sm:$0xff]
    %v68 = vpack.c.bf16 %v67, %v67
    %v69 = vld [vmem:[#allocation5] sm:$0xff]
    %v70 = vld [vmem:[#allocation5 + $0x8] sm:$0xff]
    %v71 = vld [vmem:[#allocation5 + $0x10] sm:$0xff]
    %v72 = vld [vmem:[#allocation5 + $0x18] sm:$0xff]
    %v73 = vld [vmem:[#allocation5 + $0x20] sm:$0xff]
    %v74 = vld [vmem:[#allocation5 + $0x28] sm:$0xff]
    %v75 = vld [vmem:[#allocation5 + $0x30] sm:$0xff]
    %v76 = vld [vmem:[#allocation5 + $0x38] sm:$0xff]
    %v77 = vld [vmem:[%s2] sm:$0xf]
    %v79 = vlaneseq
    %v80 = vshrl.u32 %v79, 7
    %v81 = vsub.s32 0, %v80
    %v82 = vrot.slane %v77, %v81
    %v83 = vlaneseq
    %v84 = vshrl.u32 %v83, 7
    %v85 = vsub.s32 1, %v84
    %v86 = vrot.slane %v77, %v85
    %v87 = vlaneseq
    %v88 = vshrl.u32 %v87, 7
    %v89 = vsub.s32 2, %v88
    %v90 = vrot.slane %v77, %v89
    %v91 = vlaneseq
    %v92 = vshrl.u32 %v91, 7
    %v93 = vsub.s32 3, %v92
    %v94 = vrot.slane %v77, %v93
    %v107 = vunpack.c.l.b16 %v69
    %v108 = vunpack.c.h.b16 %v69
    %v109 = vunpack.c.l.b16 %v70
    %v110 = vunpack.c.h.b16 %v70
    %v111 = vunpack.c.l.b16 %v71
    %v112 = vunpack.c.h.b16 %v71
    %v113 = vunpack.c.l.b16 %v72
    %v114 = vunpack.c.h.b16 %v72
    %v115 = vunpack.c.l.b16 %v73
    %v116 = vunpack.c.h.b16 %v73
    %v117 = vunpack.c.l.b16 %v74
    %v118 = vunpack.c.h.b16 %v74
    %v119 = vunpack.c.l.b16 %v75
    %v120 = vunpack.c.h.b16 %v75
    %v121 = vunpack.c.l.b16 %v76
    %v122 = vunpack.c.h.b16 %v76
    %v123 = vpack.c.b16 %v111, %v107
    %v124 = vpack.c.b16 %v112, %v108
    %v125 = vpack.c.b16 %v113, %v109
    %v126 = vpack.c.b16 %v114, %v110
    %v127 = vpack.c.b16 %v119, %v115
    %v128 = vpack.c.b16 %v120, %v116
    %v129 = vpack.c.b16 %v121, %v117
    %v130 = vpack.c.b16 %v122, %v118
    %vm139 = vcmask 261120
    %v141 = vsel %vm139, %v68, 0
    %143 = vmatprep.subr.bf16.mxu0 %v124
    %144 = vmatpush1.bf16.msra.mxu0 %v123
    %145 = vmatprep.subr.bf16.mxu0 %v128
    %146 = vmatpush1.bf16.msra.mxu0 %v127
    %147 = vmatprep.subr.bf16.mxu0 0
    %148 = vmatpush1.bf16.msra.mxu0 0
    %149 = vmatprep.subr.bf16.mxu0 0
    %150 = vmatpush1.bf16.msra.mxu0 0
    %151 = vmatprep.subr.bf16.mxu0 0
    %152 = vmatpush1.bf16.msra.mxu0 0
    %153 = vmatprep.subr.bf16.mxu0 0
    %154 = vmatpush1.bf16.msra.mxu0 0
    %155 = vmatprep.subr.bf16.mxu0 0
    %156 = vmatpush1.bf16.msra.mxu0 0
    %157 = vmatprep.subr.bf16.mxu0 0
    %158 = vmatpush1.bf16.msra.mxu0 0
    %159 = vmatprep.subr.bf16.mxu0 0
    %160 = vmatpush1.bf16.msra.mxu0 0
    %161 = vmatprep.subr.bf16.mxu0 0
    %162 = vmatpush1.bf16.msra.mxu0 0
    %163 = vmatprep.subr.bf16.mxu0 0
    %164 = vmatpush1.bf16.msra.mxu0 0
    %165 = vmatprep.subr.bf16.mxu0 0
    %166 = vmatpush1.bf16.msra.mxu0 0
    %167 = vmatprep.subr.bf16.mxu0 0
    %168 = vmatpush1.bf16.msra.mxu0 0
    %169 = vmatprep.subr.bf16.mxu0 0
    %170 = vmatpush1.bf16.msra.mxu0 0
    %171 = vmatprep.subr.bf16.mxu0 0
    %172 = vmatpush1.bf16.msra.mxu0 0
    %173 = vmatprep.subr.bf16.mxu0 0
    %174 = vmatpush1.bf16.msra.mxu0 0
    %175 = vmatprep.mubr.bf16.mxu0 0
    %176 = vmatmul.mubr.bf16.gmra.mrb[0].mxu0 %v141
    %v177 = vpop.f32.mrb[0].mxu0
    %v178 = vadd.f32 %v82, %v177
    %v179 = vpop.f32.mrb[0].mxu0
    %v180 = vadd.f32 %v86, %v179
    %v181 = vpop.f32.mrb[0].mxu0
    %v182 = vpop.f32.mrb[0].mxu0
    %183 = vdwg.mxu0
    %184 = vmatprep.subr.bf16.mxu0 %v126
    %185 = vmatpush1.bf16.msra.mxu0 %v125
    %186 = vmatprep.subr.bf16.mxu0 %v130
    %187 = vmatpush1.bf16.msra.mxu0 %v129
    %188 = vmatprep.subr.bf16.mxu0 0
    %189 = vmatpush1.bf16.msra.mxu0 0
    %190 = vmatprep.subr.bf16.mxu0 0
    %191 = vmatpush1.bf16.msra.mxu0 0
    %192 = vmatprep.subr.bf16.mxu0 0
    %193 = vmatpush1.bf16.msra.mxu0 0
    %194 = vmatprep.subr.bf16.mxu0 0
    %195 = vmatpush1.bf16.msra.mxu0 0
    %196 = vmatprep.subr.bf16.mxu0 0
    %197 = vmatpush1.bf16.msra.mxu0 0
    %198 = vmatprep.subr.bf16.mxu0 0
    %199 = vmatpush1.bf16.msra.mxu0 0
    %200 = vmatprep.subr.bf16.mxu0 0
    %201 = vmatpush1.bf16.msra.mxu0 0
    %202 = vmatprep.subr.bf16.mxu0 0
    %203 = vmatpush1.bf16.msra.mxu0 0
    %204 = vmatprep.subr.bf16.mxu0 0
    %205 = vmatpush1.bf16.msra.mxu0 0
    %206 = vmatprep.subr.bf16.mxu0 0
    %207 = vmatpush1.bf16.msra.mxu0 0
    %208 = vmatprep.subr.bf16.mxu0 0
    %209 = vmatpush1.bf16.msra.mxu0 0
    %210 = vmatprep.subr.bf16.mxu0 0
    %211 = vmatpush1.bf16.msra.mxu0 0
    %212 = vmatprep.subr.bf16.mxu0 0
    %213 = vmatpush1.bf16.msra.mxu0 0
    %214 = vmatprep.subr.bf16.mxu0 0
    %215 = vmatpush1.bf16.msra.mxu0 0
    %216 = vmatprep.mubr.bf16.mxu0 0
    %217 = vmatmul.mubr.bf16.gmra.mrb[0].mxu0 %v141
    %v218 = vpop.f32.mrb[0].mxu0
    %v219 = vadd.f32 %v90, %v218
    %v220 = vpop.f32.mrb[0].mxu0
    %v221 = vadd.f32 %v94, %v220
    %v222 = vpop.f32.mrb[0].mxu0
    %v223 = vpop.f32.mrb[0].mxu0
    %224 = vdwg.mxu0
    %v225 = vmax.f32 %v178, 0.0
    %v226 = vmax.f32 %v180, 0.0
    %v227 = vmax.f32 %v219, 0.0
    %v228 = vmax.f32 %v221, 0.0
    %v229 = vpack.c.bf16 %v225, %v225
    %v230 = vpack.c.bf16 %v226, %v226
    %v231 = vpack.c.bf16 %v227, %v227
    %v232 = vpack.c.bf16 %v228, %v228
    %v233 = vld [vmem:[#allocation7] sm:$0xff]
    %v234 = vld [vmem:[#allocation7 + $0x8] sm:$0xff]
    %v235 = vld [vmem:[#allocation7 + $0x10] sm:$0xff]
    %v236 = vld [vmem:[#allocation7 + $0x18] sm:$0xff]
    %v237 = vld [vmem:[#allocation7 + $0x20] sm:$0xff]
    %v238 = vld [vmem:[#allocation7 + $0x28] sm:$0xff]
    %v239 = vld [vmem:[#allocation7 + $0x30] sm:$0xff]
    %v240 = vld [vmem:[#allocation7 + $0x38] sm:$0xff]
    %v241 = vld [vmem:[#allocation7 + $0x40] sm:$0xff]
    %v242 = vld [vmem:[#allocation7 + $0x48] sm:$0xff]
    %v243 = vld [vmem:[#allocation7 + $0x50] sm:$0xff]
    %v244 = vld [vmem:[#allocation7 + $0x58] sm:$0xff]
    %v245 = vld [vmem:[#allocation7 + $0x60] sm:$0xff]
    %v246 = vld [vmem:[#allocation7 + $0x68] sm:$0xff]
    %v247 = vld [vmem:[#allocation7 + $0x70] sm:$0xff]
    %v248 = vld [vmem:[#allocation7 + $0x78] sm:$0xff]
    %v249 = vld [vmem:[#allocation7 + $0x80] sm:$0xff]
    %v250 = vld [vmem:[#allocation7 + $0x88] sm:$0xff]
    %v251 = vld [vmem:[#allocation7 + $0x90] sm:$0xff]
    %v252 = vld [vmem:[#allocation7 + $0x98] sm:$0xff]
    %v253 = vld [vmem:[#allocation7 + $0xa0] sm:$0xff]
    %v254 = vld [vmem:[#allocation7 + $0xa8] sm:$0xff]
    %v255 = vld [vmem:[#allocation7 + $0xb0] sm:$0xff]
    %v256 = vld [vmem:[#allocation7 + $0xb8] sm:$0xff]
    %v257 = vld [vmem:[#allocation7 + $0xc0] sm:$0xff]
    %v258 = vld [vmem:[#allocation7 + $0xc8] sm:$0xff]
    %v259 = vld [vmem:[#allocation7 + $0xd0] sm:$0xff]
    %v260 = vld [vmem:[#allocation7 + $0xd8] sm:$0xff]
    %v261 = vld [vmem:[#allocation7 + $0xe0] sm:$0xff]
    %v262 = vld [vmem:[#allocation7 + $0xe8] sm:$0xff]
    %v263 = vld [vmem:[#allocation7 + $0xf0] sm:$0xff]
    %v264 = vld [vmem:[#allocation7 + $0xf8] sm:$0xff]
    %v265 = vld [vmem:[#allocation7 + $0x100] sm:$0xff]
    %v266 = vld [vmem:[#allocation7 + $0x108] sm:$0xff]
    %v267 = vld [vmem:[#allocation7 + $0x110] sm:$0xff]
    %v268 = vld [vmem:[#allocation7 + $0x118] sm:$0xff]
    %v269 = vld [vmem:[#allocation7 + $0x120] sm:$0xff]
    %v270 = vld [vmem:[#allocation7 + $0x128] sm:$0xff]
    %v271 = vld [vmem:[#allocation7 + $0x130] sm:$0xff]
    %v272 = vld [vmem:[#allocation7 + $0x138] sm:$0xff]
    %v273 = vld [vmem:[#allocation7 + $0x140] sm:$0xff]
    %v274 = vld [vmem:[#allocation7 + $0x148] sm:$0xff]
    %v275 = vld [vmem:[#allocation7 + $0x150] sm:$0xff]
    %v276 = vld [vmem:[#allocation7 + $0x158] sm:$0xff]
    %v277 = vld [vmem:[#allocation7 + $0x160] sm:$0xff]
    %v278 = vld [vmem:[#allocation7 + $0x168] sm:$0xff]
    %v279 = vld [vmem:[#allocation7 + $0x170] sm:$0xff]
    %v280 = vld [vmem:[#allocation7 + $0x178] sm:$0xff]
    %v281 = vld [vmem:[#allocation7 + $0x180] sm:$0xff]
    %v282 = vld [vmem:[#allocation7 + $0x188] sm:$0xff]
    %v283 = vld [vmem:[#allocation7 + $0x190] sm:$0xff]
    %v284 = vld [vmem:[#allocation7 + $0x198] sm:$0xff]
    %v285 = vld [vmem:[#allocation7 + $0x1a0] sm:$0xff]
    %v286 = vld [vmem:[#allocation7 + $0x1a8] sm:$0xff]
    %v287 = vld [vmem:[#allocation7 + $0x1b0] sm:$0xff]
    %v288 = vld [vmem:[#allocation7 + $0x1b8] sm:$0xff]
    %v289 = vld [vmem:[#allocation7 + $0x1c0] sm:$0xff]
    %v290 = vld [vmem:[#allocation7 + $0x1c8] sm:$0xff]
    %v291 = vld [vmem:[#allocation7 + $0x1d0] sm:$0xff]
    %v292 = vld [vmem:[#allocation7 + $0x1d8] sm:$0xff]
    %v293 = vld [vmem:[#allocation7 + $0x1e0] sm:$0xff]
    %v294 = vld [vmem:[#allocation7 + $0x1e8] sm:$0xff]
    %v295 = vld [vmem:[#allocation7 + $0x1f0] sm:$0xff]
    %v296 = vld [vmem:[#allocation7 + $0x1f8] sm:$0xff]
    %v297 = vld [vmem:[#allocation7 + $0x200] sm:$0xff]
    %v298 = vld [vmem:[#allocation7 + $0x208] sm:$0xff]
    %v299 = vld [vmem:[#allocation7 + $0x210] sm:$0xff]
    %v300 = vld [vmem:[#allocation7 + $0x218] sm:$0xff]
    %v301 = vld [vmem:[#allocation7 + $0x220] sm:$0xff]
    %v302 = vld [vmem:[#allocation7 + $0x228] sm:$0xff]
    %v303 = vld [vmem:[#allocation7 + $0x230] sm:$0xff]
    %v304 = vld [vmem:[#allocation7 + $0x238] sm:$0xff]
    %v305 = vld [vmem:[#allocation7 + $0x240] sm:$0xff]
    %v306 = vld [vmem:[#allocation7 + $0x248] sm:$0xff]
    %v307 = vld [vmem:[#allocation7 + $0x250] sm:$0xff]
    %v308 = vld [vmem:[#allocation7 + $0x258] sm:$0xff]
    %v309 = vld [vmem:[#allocation7 + $0x260] sm:$0xff]
    %v310 = vld [vmem:[#allocation7 + $0x268] sm:$0xff]
    %v311 = vld [vmem:[#allocation7 + $0x270] sm:$0xff]
    %v312 = vld [vmem:[#allocation7 + $0x278] sm:$0xff]
    %v313 = vld [vmem:[#allocation7 + $0x280] sm:$0xff]
    %v314 = vld [vmem:[#allocation7 + $0x288] sm:$0xff]
    %v315 = vld [vmem:[#allocation7 + $0x290] sm:$0xff]
    %v316 = vld [vmem:[#allocation7 + $0x298] sm:$0xff]
    %v317 = vld [vmem:[#allocation7 + $0x2a0] sm:$0xff]
    %v318 = vld [vmem:[#allocation7 + $0x2a8] sm:$0xff]
    %v319 = vld [vmem:[#allocation7 + $0x2b0] sm:$0xff]
    %v320 = vld [vmem:[#allocation7 + $0x2b8] sm:$0xff]
    %v321 = vld [vmem:[#allocation7 + $0x2c0] sm:$0xff]
    %v322 = vld [vmem:[#allocation7 + $0x2c8] sm:$0xff]
    %v323 = vld [vmem:[#allocation7 + $0x2d0] sm:$0xff]
    %v324 = vld [vmem:[#allocation7 + $0x2d8] sm:$0xff]
    %v325 = vld [vmem:[#allocation7 + $0x2e0] sm:$0xff]
    %v326 = vld [vmem:[#allocation7 + $0x2e8] sm:$0xff]
    %v327 = vld [vmem:[#allocation7 + $0x2f0] sm:$0xff]
    %v328 = vld [vmem:[#allocation7 + $0x2f8] sm:$0xff]
    %v329 = vld [vmem:[#allocation7 + $0x300] sm:$0xff]
    %v330 = vld [vmem:[#allocation7 + $0x308] sm:$0xff]
    %v331 = vld [vmem:[#allocation7 + $0x310] sm:$0xff]
    %v332 = vld [vmem:[#allocation7 + $0x318] sm:$0xff]
    %v333 = vld [vmem:[#allocation7 + $0x320] sm:$0xff]
    %v334 = vld [vmem:[#allocation7 + $0x328] sm:$0xff]
    %v335 = vld [vmem:[#allocation7 + $0x330] sm:$0xff]
    %v336 = vld [vmem:[#allocation7 + $0x338] sm:$0xff]
    %v337 = vld [vmem:[#allocation7 + $0x340] sm:$0xff]
    %v338 = vld [vmem:[#allocation7 + $0x348] sm:$0xff]
    %v339 = vld [vmem:[#allocation7 + $0x350] sm:$0xff]
    %v340 = vld [vmem:[#allocation7 + $0x358] sm:$0xff]
    %v341 = vld [vmem:[#allocation7 + $0x360] sm:$0xff]
    %v342 = vld [vmem:[#allocation7 + $0x368] sm:$0xff]
    %v343 = vld [vmem:[#allocation7 + $0x370] sm:$0xff]
    %v344 = vld [vmem:[#allocation7 + $0x378] sm:$0xff]
    %v345 = vld [vmem:[#allocation7 + $0x380] sm:$0xff]
    %v346 = vld [vmem:[#allocation7 + $0x388] sm:$0xff]
    %v347 = vld [vmem:[#allocation7 + $0x390] sm:$0xff]
    %v348 = vld [vmem:[#allocation7 + $0x398] sm:$0xff]
    %v349 = vld [vmem:[#allocation7 + $0x3a0] sm:$0xff]
    %v350 = vld [vmem:[#allocation7 + $0x3a8] sm:$0xff]
    %v351 = vld [vmem:[#allocation7 + $0x3b0] sm:$0xff]
    %v352 = vld [vmem:[#allocation7 + $0x3b8] sm:$0xff]
    %v353 = vld [vmem:[#allocation7 + $0x3c0] sm:$0xff]
    %v354 = vld [vmem:[#allocation7 + $0x3c8] sm:$0xff]
    %v355 = vld [vmem:[#allocation7 + $0x3d0] sm:$0xff]
    %v356 = vld [vmem:[#allocation7 + $0x3d8] sm:$0xff]
    %v357 = vld [vmem:[#allocation7 + $0x3e0] sm:$0xff]
    %v358 = vld [vmem:[#allocation7 + $0x3e8] sm:$0xff]
    %v359 = vld [vmem:[#allocation7 + $0x3f0] sm:$0xff]
    %v360 = vld [vmem:[#allocation7 + $0x3f8] sm:$0xff]
    %v361 = vld [vmem:[%s4] sm:$0xf]
    %v363 = vlaneseq
    %v364 = vshrl.u32 %v363, 7
    %v365 = vsub.s32 0, %v364
    %v366 = vrot.slane %v361, %v365
    %v367 = vlaneseq
    %v368 = vshrl.u32 %v367, 7
    %v369 = vsub.s32 1, %v368
    %v370 = vrot.slane %v361, %v369
    %v371 = vlaneseq
    %v372 = vshrl.u32 %v371, 7
    %v373 = vsub.s32 2, %v372
    %v374 = vrot.slane %v361, %v373
    %v375 = vlaneseq
    %v376 = vshrl.u32 %v375, 7
    %v377 = vsub.s32 3, %v376
    %v378 = vrot.slane %v361, %v377
    %v511 = vunpack.c.l.b16 %v233
    %v512 = vunpack.c.h.b16 %v233
    %v513 = vunpack.c.l.b16 %v234
    %v514 = vunpack.c.h.b16 %v234
    %v515 = vunpack.c.l.b16 %v235
    %v516 = vunpack.c.h.b16 %v235
    %v517 = vunpack.c.l.b16 %v236
    %v518 = vunpack.c.h.b16 %v236
    %v519 = vunpack.c.l.b16 %v237
    %v520 = vunpack.c.h.b16 %v237
    %v521 = vunpack.c.l.b16 %v238
    %v522 = vunpack.c.h.b16 %v238
    %v523 = vunpack.c.l.b16 %v239
    %v524 = vunpack.c.h.b16 %v239
    %v525 = vunpack.c.l.b16 %v240
    %v526 = vunpack.c.h.b16 %v240
    %v527 = vunpack.c.l.b16 %v241
    %v528 = vunpack.c.h.b16 %v241
    %v529 = vunpack.c.l.b16 %v242
    %v530 = vunpack.c.h.b16 %v242
    %v531 = vunpack.c.l.b16 %v243
    %v532 = vunpack.c.h.b16 %v243
    %v533 = vunpack.c.l.b16 %v244
    %v534 = vunpack.c.h.b16 %v244
    %v535 = vunpack.c.l.b16 %v245
    %v536 = vunpack.c.h.b16 %v245
    %v537 = vunpack.c.l.b16 %v246
    %v538 = vunpack.c.h.b16 %v246
    %v539 = vunpack.c.l.b16 %v247
    %v540 = vunpack.c.h.b16 %v247
    %v541 = vunpack.c.l.b16 %v248
    %v542 = vunpack.c.h.b16 %v248
    %v543 = vunpack.c.l.b16 %v249
    %v544 = vunpack.c.h.b16 %v249
    %v545 = vunpack.c.l.b16 %v250
    %v546 = vunpack.c.h.b16 %v250
    %v547 = vunpack.c.l.b16 %v251
    %v548 = vunpack.c.h.b16 %v251
    %v549 = vunpack.c.l.b16 %v252
    %v550 = vunpack.c.h.b16 %v252
    %v551 = vunpack.c.l.b16 %v253
    %v552 = vunpack.c.h.b16 %v253
    %v553 = vunpack.c.l.b16 %v254
    %v554 = vunpack.c.h.b16 %v254
    %v555 = vunpack.c.l.b16 %v255
    %v556 = vunpack.c.h.b16 %v255
    %v557 = vunpack.c.l.b16 %v256
    %v558 = vunpack.c.h.b16 %v256
    %v559 = vunpack.c.l.b16 %v257
    %v560 = vunpack.c.h.b16 %v257
    %v561 = vunpack.c.l.b16 %v258
    %v562 = vunpack.c.h.b16 %v258
    %v563 = vunpack.c.l.b16 %v259
    %v564 = vunpack.c.h.b16 %v259
    %v565 = vunpack.c.l.b16 %v260
    %v566 = vunpack.c.h.b16 %v260
    %v567 = vunpack.c.l.b16 %v261
    %v568 = vunpack.c.h.b16 %v261
    %v569 = vunpack.c.l.b16 %v262
    %v570 = vunpack.c.h.b16 %v262
    %v571 = vunpack.c.l.b16 %v263
    %v572 = vunpack.c.h.b16 %v263
    %v573 = vunpack.c.l.b16 %v264
    %v574 = vunpack.c.h.b16 %v264
    %v575 = vunpack.c.l.b16 %v265
    %v576 = vunpack.c.h.b16 %v265
    %v577 = vunpack.c.l.b16 %v266
    %v578 = vunpack.c.h.b16 %v266
    %v579 = vunpack.c.l.b16 %v267
    %v580 = vunpack.c.h.b16 %v267
    %v581 = vunpack.c.l.b16 %v268
    %v582 = vunpack.c.h.b16 %v268
    %v583 = vunpack.c.l.b16 %v269
    %v584 = vunpack.c.h.b16 %v269
    %v585 = vunpack.c.l.b16 %v270
    %v586 = vunpack.c.h.b16 %v270
    %v587 = vunpack.c.l.b16 %v271
    %v588 = vunpack.c.h.b16 %v271
    %v589 = vunpack.c.l.b16 %v272
    %v590 = vunpack.c.h.b16 %v272
    %v591 = vunpack.c.l.b16 %v273
    %v592 = vunpack.c.h.b16 %v273
    %v593 = vunpack.c.l.b16 %v274
    %v594 = vunpack.c.h.b16 %v274
    %v595 = vunpack.c.l.b16 %v275
    %v596 = vunpack.c.h.b16 %v275
    %v597 = vunpack.c.l.b16 %v276
    %v598 = vunpack.c.h.b16 %v276
    %v599 = vunpack.c.l.b16 %v277
    %v600 = vunpack.c.h.b16 %v277
    %v601 = vunpack.c.l.b16 %v278
    %v602 = vunpack.c.h.b16 %v278
    %v603 = vunpack.c.l.b16 %v279
    %v604 = vunpack.c.h.b16 %v279
    %v605 = vunpack.c.l.b16 %v280
    %v606 = vunpack.c.h.b16 %v280
    %v607 = vunpack.c.l.b16 %v281
    %v608 = vunpack.c.h.b16 %v281
    %v609 = vunpack.c.l.b16 %v282
    %v610 = vunpack.c.h.b16 %v282
    %v611 = vunpack.c.l.b16 %v283
    %v612 = vunpack.c.h.b16 %v283
    %v613 = vunpack.c.l.b16 %v284
    %v614 = vunpack.c.h.b16 %v284
    %v615 = vunpack.c.l.b16 %v285
    %v616 = vunpack.c.h.b16 %v285
    %v617 = vunpack.c.l.b16 %v286
    %v618 = vunpack.c.h.b16 %v286
    %v619 = vunpack.c.l.b16 %v287
    %v620 = vunpack.c.h.b16 %v287
    %v621 = vunpack.c.l.b16 %v288
    %v622 = vunpack.c.h.b16 %v288
    %v623 = vunpack.c.l.b16 %v289
    %v624 = vunpack.c.h.b16 %v289
    %v625 = vunpack.c.l.b16 %v290
    %v626 = vunpack.c.h.b16 %v290
    %v627 = vunpack.c.l.b16 %v291
    %v628 = vunpack.c.h.b16 %v291
    %v629 = vunpack.c.l.b16 %v292
    %v630 = vunpack.c.h.b16 %v292
    %v631 = vunpack.c.l.b16 %v293
    %v632 = vunpack.c.h.b16 %v293
    %v633 = vunpack.c.l.b16 %v294
    %v634 = vunpack.c.h.b16 %v294
    %v635 = vunpack.c.l.b16 %v295
    %v636 = vunpack.c.h.b16 %v295
    %v637 = vunpack.c.l.b16 %v296
    %v638 = vunpack.c.h.b16 %v296
    %v639 = vunpack.c.l.b16 %v297
    %v640 = vunpack.c.h.b16 %v297
    %v641 = vunpack.c.l.b16 %v298
    %v642 = vunpack.c.h.b16 %v298
    %v643 = vunpack.c.l.b16 %v299
    %v644 = vunpack.c.h.b16 %v299
    %v645 = vunpack.c.l.b16 %v300
    %v646 = vunpack.c.h.b16 %v300
    %v647 = vunpack.c.l.b16 %v301
    %v648 = vunpack.c.h.b16 %v301
    %v649 = vunpack.c.l.b16 %v302
    %v650 = vunpack.c.h.b16 %v302
    %v651 = vunpack.c.l.b16 %v303
    %v652 = vunpack.c.h.b16 %v303
    %v653 = vunpack.c.l.b16 %v304
    %v654 = vunpack.c.h.b16 %v304
    %v655 = vunpack.c.l.b16 %v305
    %v656 = vunpack.c.h.b16 %v305
    %v657 = vunpack.c.l.b16 %v306
    %v658 = vunpack.c.h.b16 %v306
    %v659 = vunpack.c.l.b16 %v307
    %v660 = vunpack.c.h.b16 %v307
    %v661 = vunpack.c.l.b16 %v308
    %v662 = vunpack.c.h.b16 %v308
    %v663 = vunpack.c.l.b16 %v309
    %v664 = vunpack.c.h.b16 %v309
    %v665 = vunpack.c.l.b16 %v310
    %v666 = vunpack.c.h.b16 %v310
    %v667 = vunpack.c.l.b16 %v311
    %v668 = vunpack.c.h.b16 %v311
    %v669 = vunpack.c.l.b16 %v312
    %v670 = vunpack.c.h.b16 %v312
    %v671 = vunpack.c.l.b16 %v313
    %v672 = vunpack.c.h.b16 %v313
    %v673 = vunpack.c.l.b16 %v314
    %v674 = vunpack.c.h.b16 %v314
    %v675 = vunpack.c.l.b16 %v315
    %v676 = vunpack.c.h.b16 %v315
    %v677 = vunpack.c.l.b16 %v316
    %v678 = vunpack.c.h.b16 %v316
    %v679 = vunpack.c.l.b16 %v317
    %v680 = vunpack.c.h.b16 %v317
    %v681 = vunpack.c.l.b16 %v318
    %v682 = vunpack.c.h.b16 %v318
    %v683 = vunpack.c.l.b16 %v319
    %v684 = vunpack.c.h.b16 %v319
    %v685 = vunpack.c.l.b16 %v320
    %v686 = vunpack.c.h.b16 %v320
    %v687 = vunpack.c.l.b16 %v321
    %v688 = vunpack.c.h.b16 %v321
    %v689 = vunpack.c.l.b16 %v322
    %v690 = vunpack.c.h.b16 %v322
    %v691 = vunpack.c.l.b16 %v323
    %v692 = vunpack.c.h.b16 %v323
    %v693 = vunpack.c.l.b16 %v324
    %v694 = vunpack.c.h.b16 %v324
    %v695 = vunpack.c.l.b16 %v325
    %v696 = vunpack.c.h.b16 %v325
    %v697 = vunpack.c.l.b16 %v326
    %v698 = vunpack.c.h.b16 %v326
    %v699 = vunpack.c.l.b16 %v327
    %v700 = vunpack.c.h.b16 %v327
    %v701 = vunpack.c.l.b16 %v328
    %v702 = vunpack.c.h.b16 %v328
    %v703 = vunpack.c.l.b16 %v329
    %v704 = vunpack.c.h.b16 %v329
    %v705 = vunpack.c.l.b16 %v330
    %v706 = vunpack.c.h.b16 %v330
    %v707 = vunpack.c.l.b16 %v331
    %v708 = vunpack.c.h.b16 %v331
    %v709 = vunpack.c.l.b16 %v332
    %v710 = vunpack.c.h.b16 %v332
    %v711 = vunpack.c.l.b16 %v333
    %v712 = vunpack.c.h.b16 %v333
    %v713 = vunpack.c.l.b16 %v334
    %v714 = vunpack.c.h.b16 %v334
    %v715 = vunpack.c.l.b16 %v335
    %v716 = vunpack.c.h.b16 %v335
    %v717 = vunpack.c.l.b16 %v336
    %v718 = vunpack.c.h.b16 %v336
    %v719 = vunpack.c.l.b16 %v337
    %v720 = vunpack.c.h.b16 %v337
    %v721 = vunpack.c.l.b16 %v338
    %v722 = vunpack.c.h.b16 %v338
    %v723 = vunpack.c.l.b16 %v339
    %v724 = vunpack.c.h.b16 %v339
    %v725 = vunpack.c.l.b16 %v340
    %v726 = vunpack.c.h.b16 %v340
    %v727 = vunpack.c.l.b16 %v341
    %v728 = vunpack.c.h.b16 %v341
    %v729 = vunpack.c.l.b16 %v342
    %v730 = vunpack.c.h.b16 %v342
    %v731 = vunpack.c.l.b16 %v343
    %v732 = vunpack.c.h.b16 %v343
    %v733 = vunpack.c.l.b16 %v344
    %v734 = vunpack.c.h.b16 %v344
    %v735 = vunpack.c.l.b16 %v345
    %v736 = vunpack.c.h.b16 %v345
    %v737 = vunpack.c.l.b16 %v346
    %v738 = vunpack.c.h.b16 %v346
    %v739 = vunpack.c.l.b16 %v347
    %v740 = vunpack.c.h.b16 %v347
    %v741 = vunpack.c.l.b16 %v348
    %v742 = vunpack.c.h.b16 %v348
    %v743 = vunpack.c.l.b16 %v349
    %v744 = vunpack.c.h.b16 %v349
    %v745 = vunpack.c.l.b16 %v350
    %v746 = vunpack.c.h.b16 %v350
    %v747 = vunpack.c.l.b16 %v351
    %v748 = vunpack.c.h.b16 %v351
    %v749 = vunpack.c.l.b16 %v352
    %v750 = vunpack.c.h.b16 %v352
    %v751 = vunpack.c.l.b16 %v353
    %v752 = vunpack.c.h.b16 %v353
    %v753 = vunpack.c.l.b16 %v354
    %v754 = vunpack.c.h.b16 %v354
    %v755 = vunpack.c.l.b16 %v355
    %v756 = vunpack.c.h.b16 %v355
    %v757 = vunpack.c.l.b16 %v356
    %v758 = vunpack.c.h.b16 %v356
    %v759 = vunpack.c.l.b16 %v357
    %v760 = vunpack.c.h.b16 %v357
    %v761 = vunpack.c.l.b16 %v358
    %v762 = vunpack.c.h.b16 %v358
    %v763 = vunpack.c.l.b16 %v359
    %v764 = vunpack.c.h.b16 %v359
    %v765 = vunpack.c.l.b16 %v360
    %v766 = vunpack.c.h.b16 %v360
    %v767 = vpack.c.b16 %v515, %v511
    %v768 = vpack.c.b16 %v516, %v512
    %v769 = vpack.c.b16 %v517, %v513
    %v770 = vpack.c.b16 %v518, %v514
    %v771 = vpack.c.b16 %v523, %v519
    %v772 = vpack.c.b16 %v524, %v520
    %v773 = vpack.c.b16 %v525, %v521
    %v774 = vpack.c.b16 %v526, %v522
    %v775 = vpack.c.b16 %v531, %v527
    %v776 = vpack.c.b16 %v532, %v528
    %v777 = vpack.c.b16 %v533, %v529
    %v778 = vpack.c.b16 %v534, %v530
    %v779 = vpack.c.b16 %v539, %v535
    %v780 = vpack.c.b16 %v540, %v536
    %v781 = vpack.c.b16 %v541, %v537
    %v782 = vpack.c.b16 %v542, %v538
    %v783 = vpack.c.b16 %v547, %v543
    %v784 = vpack.c.b16 %v548, %v544
    %v785 = vpack.c.b16 %v549, %v545
    %v786 = vpack.c.b16 %v550, %v546
    %v787 = vpack.c.b16 %v555, %v551
    %v788 = vpack.c.b16 %v556, %v552
    %v789 = vpack.c.b16 %v557, %v553
    %v790 = vpack.c.b16 %v558, %v554
    %v791 = vpack.c.b16 %v563, %v559
    %v792 = vpack.c.b16 %v564, %v560
    %v793 = vpack.c.b16 %v565, %v561
    %v794 = vpack.c.b16 %v566, %v562
    %v795 = vpack.c.b16 %v571, %v567
    %v796 = vpack.c.b16 %v572, %v568
    %v797 = vpack.c.b16 %v573, %v569
    %v798 = vpack.c.b16 %v574, %v570
    %v799 = vpack.c.b16 %v579, %v575
    %v800 = vpack.c.b16 %v580, %v576
    %v801 = vpack.c.b16 %v581, %v577
    %v802 = vpack.c.b16 %v582, %v578
    %v803 = vpack.c.b16 %v587, %v583
    %v804 = vpack.c.b16 %v588, %v584
    %v805 = vpack.c.b16 %v589, %v585
    %v806 = vpack.c.b16 %v590, %v586
    %v807 = vpack.c.b16 %v595, %v591
    %v808 = vpack.c.b16 %v596, %v592
    %v809 = vpack.c.b16 %v597, %v593
    %v810 = vpack.c.b16 %v598, %v594
    %v811 = vpack.c.b16 %v603, %v599
    %v812 = vpack.c.b16 %v604, %v600
    %v813 = vpack.c.b16 %v605, %v601
    %v814 = vpack.c.b16 %v606, %v602
    %v815 = vpack.c.b16 %v611, %v607
    %v816 = vpack.c.b16 %v612, %v608
    %v817 = vpack.c.b16 %v613, %v609
    %v818 = vpack.c.b16 %v614, %v610
    %v819 = vpack.c.b16 %v619, %v615
    %v820 = vpack.c.b16 %v620, %v616
    %v821 = vpack.c.b16 %v621, %v617
    %v822 = vpack.c.b16 %v622, %v618
    %v823 = vpack.c.b16 %v627, %v623
    %v824 = vpack.c.b16 %v628, %v624
    %v825 = vpack.c.b16 %v629, %v625
    %v826 = vpack.c.b16 %v630, %v626
    %v827 = vpack.c.b16 %v635, %v631
    %v828 = vpack.c.b16 %v636, %v632
    %v829 = vpack.c.b16 %v637, %v633
    %v830 = vpack.c.b16 %v638, %v634
    %v831 = vpack.c.b16 %v643, %v639
    %v832 = vpack.c.b16 %v644, %v640
    %v833 = vpack.c.b16 %v645, %v641
    %v834 = vpack.c.b16 %v646, %v642
    %v835 = vpack.c.b16 %v651, %v647
    %v836 = vpack.c.b16 %v652, %v648
    %v837 = vpack.c.b16 %v653, %v649
    %v838 = vpack.c.b16 %v654, %v650
    %v839 = vpack.c.b16 %v659, %v655
    %v840 = vpack.c.b16 %v660, %v656
    %v841 = vpack.c.b16 %v661, %v657
    %v842 = vpack.c.b16 %v662, %v658
    %v843 = vpack.c.b16 %v667, %v663
    %v844 = vpack.c.b16 %v668, %v664
    %v845 = vpack.c.b16 %v669, %v665
    %v846 = vpack.c.b16 %v670, %v666
    %v847 = vpack.c.b16 %v675, %v671
    %v848 = vpack.c.b16 %v676, %v672
    %v849 = vpack.c.b16 %v677, %v673
    %v850 = vpack.c.b16 %v678, %v674
    %v851 = vpack.c.b16 %v683, %v679
    %v852 = vpack.c.b16 %v684, %v680
    %v853 = vpack.c.b16 %v685, %v681
    %v854 = vpack.c.b16 %v686, %v682
    %v855 = vpack.c.b16 %v691, %v687
    %v856 = vpack.c.b16 %v692, %v688
    %v857 = vpack.c.b16 %v693, %v689
    %v858 = vpack.c.b16 %v694, %v690
    %v859 = vpack.c.b16 %v699, %v695
    %v860 = vpack.c.b16 %v700, %v696
    %v861 = vpack.c.b16 %v701, %v697
    %v862 = vpack.c.b16 %v702, %v698
    %v863 = vpack.c.b16 %v707, %v703
    %v864 = vpack.c.b16 %v708, %v704
    %v865 = vpack.c.b16 %v709, %v705
    %v866 = vpack.c.b16 %v710, %v706
    %v867 = vpack.c.b16 %v715, %v711
    %v868 = vpack.c.b16 %v716, %v712
    %v869 = vpack.c.b16 %v717, %v713
    %v870 = vpack.c.b16 %v718, %v714
    %v871 = vpack.c.b16 %v723, %v719
    %v872 = vpack.c.b16 %v724, %v720
    %v873 = vpack.c.b16 %v725, %v721
    %v874 = vpack.c.b16 %v726, %v722
    %v875 = vpack.c.b16 %v731, %v727
    %v876 = vpack.c.b16 %v732, %v728
    %v877 = vpack.c.b16 %v733, %v729
    %v878 = vpack.c.b16 %v734, %v730
    %v879 = vpack.c.b16 %v739, %v735
    %v880 = vpack.c.b16 %v740, %v736
    %v881 = vpack.c.b16 %v741, %v737
    %v882 = vpack.c.b16 %v742, %v738
    %v883 = vpack.c.b16 %v747, %v743
    %v884 = vpack.c.b16 %v748, %v744
    %v885 = vpack.c.b16 %v749, %v745
    %v886 = vpack.c.b16 %v750, %v746
    %v887 = vpack.c.b16 %v755, %v751
    %v888 = vpack.c.b16 %v756, %v752
    %v889 = vpack.c.b16 %v757, %v753
    %v890 = vpack.c.b16 %v758, %v754
    %v891 = vpack.c.b16 %v763, %v759
    %v892 = vpack.c.b16 %v764, %v760
    %v893 = vpack.c.b16 %v765, %v761
    %v894 = vpack.c.b16 %v766, %v762
    %1023 = vmatprep.subr.bf16.mxu0 %v768
    %1024 = vmatpush1.bf16.msra.mxu0 %v767
    %1025 = vmatprep.subr.bf16.mxu0 %v772
    %1026 = vmatpush1.bf16.msra.mxu0 %v771
    %1027 = vmatprep.subr.bf16.mxu0 %v776
    %1028 = vmatpush1.bf16.msra.mxu0 %v775
    %1029 = vmatprep.subr.bf16.mxu0 %v780
    %1030 = vmatpush1.bf16.msra.mxu0 %v779
    %1031 = vmatprep.subr.bf16.mxu0 %v784
    %1032 = vmatpush1.bf16.msra.mxu0 %v783
    %1033 = vmatprep.subr.bf16.mxu0 %v788
    %1034 = vmatpush1.bf16.msra.mxu0 %v787
    %1035 = vmatprep.subr.bf16.mxu0 %v792
    %1036 = vmatpush1.bf16.msra.mxu0 %v791
    %1037 = vmatprep.subr.bf16.mxu0 %v796
    %1038 = vmatpush1.bf16.msra.mxu0 %v795
    %1039 = vmatprep.subr.bf16.mxu0 %v800
    %1040 = vmatpush1.bf16.msra.mxu0 %v799
    %1041 = vmatprep.subr.bf16.mxu0 %v804
    %1042 = vmatpush1.bf16.msra.mxu0 %v803
    %1043 = vmatprep.subr.bf16.mxu0 %v808
    %1044 = vmatpush1.bf16.msra.mxu0 %v807
    %1045 = vmatprep.subr.bf16.mxu0 %v812
    %1046 = vmatpush1.bf16.msra.mxu0 %v811
    %1047 = vmatprep.subr.bf16.mxu0 %v816
    %1048 = vmatpush1.bf16.msra.mxu0 %v815
    %1049 = vmatprep.subr.bf16.mxu0 %v820
    %1050 = vmatpush1.bf16.msra.mxu0 %v819
    %1051 = vmatprep.subr.bf16.mxu0 %v824
    %1052 = vmatpush1.bf16.msra.mxu0 %v823
    %1053 = vmatprep.subr.bf16.mxu0 %v828
    %1054 = vmatpush1.bf16.msra.mxu0 %v827
    %1055 = vmatprep.mubr.bf16.mxu0 %v230
    %1056 = vmatmul.mubr.bf16.gmra.mrb[0].mxu0 %v229
    %v1057 = vpop.f32.mrb[0].mxu0
    %v1058 = vadd.f32 %v366, %v1057
    %v1059 = vpop.f32.mrb[0].mxu0
    %v1060 = vadd.f32 %v370, %v1059
    %v1061 = vpop.f32.mrb[0].mxu0
    %v1062 = vpop.f32.mrb[0].mxu0
    %1063 = vdwg.mxu0
    %1064 = vmatprep.subr.bf16.mxu0 %v832
    %1065 = vmatpush1.bf16.msra.mxu0 %v831
    %1066 = vmatprep.subr.bf16.mxu0 %v836
    %1067 = vmatpush1.bf16.msra.mxu0 %v835
    %1068 = vmatprep.subr.bf16.mxu0 %v840
    %1069 = vmatpush1.bf16.msra.mxu0 %v839
    %1070 = vmatprep.subr.bf16.mxu0 %v844
    %1071 = vmatpush1.bf16.msra.mxu0 %v843
    %1072 = vmatprep.subr.bf16.mxu0 %v848
    %1073 = vmatpush1.bf16.msra.mxu0 %v847
    %1074 = vmatprep.subr.bf16.mxu0 %v852
    %1075 = vmatpush1.bf16.msra.mxu0 %v851
    %1076 = vmatprep.subr.bf16.mxu0 %v856
    %1077 = vmatpush1.bf16.msra.mxu0 %v855
    %1078 = vmatprep.subr.bf16.mxu0 %v860
    %1079 = vmatpush1.bf16.msra.mxu0 %v859
    %1080 = vmatprep.subr.bf16.mxu0 %v864
    %1081 = vmatpush1.bf16.msra.mxu0 %v863
    %1082 = vmatprep.subr.bf16.mxu0 %v868
    %1083 = vmatpush1.bf16.msra.mxu0 %v867
    %1084 = vmatprep.subr.bf16.mxu0 %v872
    %1085 = vmatpush1.bf16.msra.mxu0 %v871
    %1086 = vmatprep.subr.bf16.mxu0 %v876
    %1087 = vmatpush1.bf16.msra.mxu0 %v875
    %1088 = vmatprep.subr.bf16.mxu0 %v880
    %1089 = vmatpush1.bf16.msra.mxu0 %v879
    %1090 = vmatprep.subr.bf16.mxu0 %v884
    %1091 = vmatpush1.bf16.msra.mxu0 %v883
    %1092 = vmatprep.subr.bf16.mxu0 %v888
    %1093 = vmatpush1.bf16.msra.mxu0 %v887
    %1094 = vmatprep.subr.bf16.mxu0 %v892
    %1095 = vmatpush1.bf16.msra.mxu0 %v891
    %1096 = vmatprep.mubr.bf16.mxu0 %v232
    %1097 = vmatmul.mubr.bf16.gmra.mrb[0].mxu0 %v231
    %v1098 = vpop.f32.mrb[0].mxu0
    %v1099 = vadd.f32 %v1058, %v1098
    %v1100 = vpop.f32.mrb[0].mxu0
    %v1101 = vadd.f32 %v1060, %v1100
    %v1102 = vpop.f32.mrb[0].mxu0
    %v1103 = vpop.f32.mrb[0].mxu0
    %1104 = vdwg.mxu0
    %1105 = vmatprep.subr.bf16.mxu0 %v770
    %1106 = vmatpush1.bf16.msra.mxu0 %v769
    %1107 = vmatprep.subr.bf16.mxu0 %v774
    %1108 = vmatpush1.bf16.msra.mxu0 %v773
    %1109 = vmatprep.subr.bf16.mxu0 %v778
    %1110 = vmatpush1.bf16.msra.mxu0 %v777
    %1111 = vmatprep.subr.bf16.mxu0 %v782
    %1112 = vmatpush1.bf16.msra.mxu0 %v781
    %1113 = vmatprep.subr.bf16.mxu0 %v786
    %1114 = vmatpush1.bf16.msra.mxu0 %v785
    %1115 = vmatprep.subr.bf16.mxu0 %v790
    %1116 = vmatpush1.bf16.msra.mxu0 %v789
    %1117 = vmatprep.subr.bf16.mxu0 %v794
    %1118 = vmatpush1.bf16.msra.mxu0 %v793
    %1119 = vmatprep.subr.bf16.mxu0 %v798
    %1120 = vmatpush1.bf16.msra.mxu0 %v797
    %1121 = vmatprep.subr.bf16.mxu0 %v802
    %1122 = vmatpush1.bf16.msra.mxu0 %v801
    %1123 = vmatprep.subr.bf16.mxu0 %v806
    %1124 = vmatpush1.bf16.msra.mxu0 %v805
    %1125 = vmatprep.subr.bf16.mxu0 %v810
    %1126 = vmatpush1.bf16.msra.mxu0 %v809
    %1127 = vmatprep.subr.bf16.mxu0 %v814
    %1128 = vmatpush1.bf16.msra.mxu0 %v813
    %1129 = vmatprep.subr.bf16.mxu0 %v818
    %1130 = vmatpush1.bf16.msra.mxu0 %v817
    %1131 = vmatprep.subr.bf16.mxu0 %v822
    %1132 = vmatpush1.bf16.msra.mxu0 %v821
    %1133 = vmatprep.subr.bf16.mxu0 %v826
    %1134 = vmatpush1.bf16.msra.mxu0 %v825
    %1135 = vmatprep.subr.bf16.mxu0 %v830
    %1136 = vmatpush1.bf16.msra.mxu0 %v829
    %1137 = vmatprep.mubr.bf16.mxu0 %v230
    %1138 = vmatmul.mubr.bf16.gmra.mrb[0].mxu0 %v229
    %v1139 = vpop.f32.mrb[0].mxu0
    %v1140 = vadd.f32 %v374, %v1139
    %v1141 = vpop.f32.mrb[0].mxu0
    %v1142 = vadd.f32 %v378, %v1141
    %v1143 = vpop.f32.mrb[0].mxu0
    %v1144 = vpop.f32.mrb[0].mxu0
    %1145 = vdwg.mxu0
    %1146 = vmatprep.subr.bf16.mxu0 %v834
    %1147 = vmatpush1.bf16.msra.mxu0 %v833
    %1148 = vmatprep.subr.bf16.mxu0 %v838
    %1149 = vmatpush1.bf16.msra.mxu0 %v837
    %1150 = vmatprep.subr.bf16.mxu0 %v842
    %1151 = vmatpush1.bf16.msra.mxu0 %v841
    %1152 = vmatprep.subr.bf16.mxu0 %v846
    %1153 = vmatpush1.bf16.msra.mxu0 %v845
    %1154 = vmatprep.subr.bf16.mxu0 %v850
    %1155 = vmatpush1.bf16.msra.mxu0 %v849
    %1156 = vmatprep.subr.bf16.mxu0 %v854
    %1157 = vmatpush1.bf16.msra.mxu0 %v853
    %1158 = vmatprep.subr.bf16.mxu0 %v858
    %1159 = vmatpush1.bf16.msra.mxu0 %v857
    %1160 = vmatprep.subr.bf16.mxu0 %v862
    %1161 = vmatpush1.bf16.msra.mxu0 %v861
    %1162 = vmatprep.subr.bf16.mxu0 %v866
    %1163 = vmatpush1.bf16.msra.mxu0 %v865
    %1164 = vmatprep.subr.bf16.mxu0 %v870
    %1165 = vmatpush1.bf16.msra.mxu0 %v869
    %1166 = vmatprep.subr.bf16.mxu0 %v874
    %1167 = vmatpush1.bf16.msra.mxu0 %v873
    %1168 = vmatprep.subr.bf16.mxu0 %v878
    %1169 = vmatpush1.bf16.msra.mxu0 %v877
    %1170 = vmatprep.subr.bf16.mxu0 %v882
    %1171 = vmatpush1.bf16.msra.mxu0 %v881
    %1172 = vmatprep.subr.bf16.mxu0 %v886
    %1173 = vmatpush1.bf16.msra.mxu0 %v885
    %1174 = vmatprep.subr.bf16.mxu0 %v890
    %1175 = vmatpush1.bf16.msra.mxu0 %v889
    %1176 = vmatprep.subr.bf16.mxu0 %v894
    %1177 = vmatpush1.bf16.msra.mxu0 %v893
    %1178 = vmatprep.mubr.bf16.mxu0 %v232
    %1179 = vmatmul.mubr.bf16.gmra.mrb[0].mxu0 %v231
    %v1180 = vpop.f32.mrb[0].mxu0
    %v1181 = vadd.f32 %v1140, %v1180
    %v1182 = vpop.f32.mrb[0].mxu0
    %v1183 = vadd.f32 %v1142, %v1182
    %v1184 = vpop.f32.mrb[0].mxu0
    %v1185 = vpop.f32.mrb[0].mxu0
    %1186 = vdwg.mxu0
    %v1187 = vmax.f32 %v1099, 0.0
    %v1188 = vmax.f32 %v1101, 0.0
    %v1189 = vmax.f32 %v1181, 0.0
    %v1190 = vmax.f32 %v1183, 0.0
    %v1191 = vld [vmem:[%s5] sm:$0xf]
    %v1193 = vlaneseq
    %v1194 = vshrl.u32 %v1193, 7
    %v1195 = vsub.s32 0, %v1194
    %v1196 = vrot.slane %v1191, %v1195
    %v1197 = vlaneseq
    %v1198 = vshrl.u32 %v1197, 7
    %v1199 = vsub.s32 1, %v1198
    %v1200 = vrot.slane %v1191, %v1199
    %v1201 = vlaneseq
    %v1202 = vshrl.u32 %v1201, 7
    %v1203 = vsub.s32 2, %v1202
    %v1204 = vrot.slane %v1191, %v1203
    %v1205 = vlaneseq
    %v1206 = vshrl.u32 %v1205, 7
    %v1207 = vsub.s32 3, %v1206
    %v1208 = vrot.slane %v1191, %v1207
    %v1213 = vmul.f32 %v1187, %v1196
    %v1214 = vmul.f32 %v1188, %v1200
    %v1215 = vmul.f32 %v1189, %v1204
    %v1216 = vmul.f32 %v1190, %v1208
    %v1217 = vadd.f32 %v1213, %v1214
    %v1218 = vadd.f32 %v1217, %v1215
    %v1219 = vadd.f32 %v1218, %v1216
    %1220 = vadd.xlane.f32.xlu0 %v1219
    %v1221 = vpop.xlane.xlu0 %1220
    %s1222 = sld [smem:[#allocation2]]
    %v1223 = vstv %s1222
    %v1224 = vadd.f32 %v1221, %v1223
    %v1225 = vxor.u32 %v1224, 2147483648
    %v1226 = vmul.f32 %v1225, 1.442695
    %v1227 = vpow.pop %v1226
    %v1228 = vadd.f32 %v1227, 1.0
    %v1229 = vrcp.pop %v1228
    %v1230 = vmul.f32 1.0, %v1229
    %vm1231 = vcmask 7168
    %1232 = vst.msk [vmem:[%s7] sm:$0xff] %vm1231, %v1230
    // Predicated region
    $region42: #{discriminator_forward.1} parent=1 // pred_check
      _
    $region43: #{discriminator_forward.1} parent=1 // pred_check_branch
      %1234 = sbr.rel (0) target = $region45
    $region44: #{discriminator_forward.1} parent=1 // pred_region
      _
    $region45: #{discriminator_forward.1} parent=1 // pred_fallthru
      _
    // Predicated region
    $region46: #{discriminator_forward.1} parent=1 // pred_check
      _
    $region47: #{discriminator_forward.1} parent=1 // pred_check_branch
      %1236 = sbr.rel (0) target = $region49
    $region48: #{discriminator_forward.1} parent=1 // pred_region
      _
    $region49: #{discriminator_forward.1} parent=1 // pred_fallthru
      _
    %1237 = vsyncpa [#allocation4], 1
    %1238 = vsyncpa [#allocation6], 1

</llo_original>
